<compile_context>
chip_gen: v7x
topology: tpu7x:2x2x1
jax: 0.10.0
libtpu: 0.0.40
codegen_flags: <defaults>
</compile_context>

<pallas_src>
import functools

import jax
import jax.numpy as jnp
from jax.experimental import pallas as pl
from jax.experimental.pallas import tpu as pltpu


# ----------------------------------------------------------------------------
# helpers
# ----------------------------------------------------------------------------
def _round_up(n, m):
    return ((n + m - 1) // m) * m


def _choose_tile_r(n_rows, v_pad):
    # Keep the per-tile f32 logits block <= ~6 MiB so that double-buffered bf16
    # x tiles + resident bf16 W + the tiny per-row outputs fit the v7x 64 MiB
    # VMEM (and the raised scoped limit) with headroom; v5e/v6e have more room.
    budget_bytes = 6 * 1024 * 1024
    t = budget_bytes // (v_pad * 4)
    t = max(8, min(512, t))
    t = (t // 8) * 8                      # sublane-aligned row tile
    t = min(t, _round_up(n_rows, 8))      # don't over-pad tiny problems
    return t


def _masked_nll(lp, w, eps=1e-8):
    """-sum(w * lp) / sum(w), guarded against an all-zero weight sum."""
    den = jnp.sum(w)
    return -jnp.sum(lp * w) / jnp.maximum(den, eps)


# ----------------------------------------------------------------------------
# Fused kernel: log_softmax(X @ W) + target-gather + argmax, per row tile.
# Emits only per-row scalars; the (rows, V) log-prob tile never leaves VMEM.
# ----------------------------------------------------------------------------
def _fused_logp_kernel(x_ref, w_ref, tgt_ref,
                       lp_tgt_ref, lp_max_ref, amax_ref, *, v_real):
    # x: (R, H) bf16, w: (H, Vp) bf16, tgt: (R, 1) int32
    logits = jnp.dot(x_ref[...], w_ref[...],
                     preferred_element_type=jnp.float32)         # MXU, f32 acc
    v_pad = logits.shape[-1]
    iota_v = jax.lax.broadcasted_iota(jnp.int32, logits.shape, 1)
    if v_real != v_pad:                                          # static branch
        logits = jnp.where(iota_v < v_real, logits, -jnp.inf)

    m = jnp.max(logits, axis=-1, keepdims=True)                  # (R, 1)
    lse = jnp.log(jnp.sum(jnp.exp(logits - m), axis=-1, keepdims=True)) + m

    tgt = tgt_ref[...]                                           # (R, 1) int32
    # logp[row, target[row]]: masked select-sum, no materialized f32 one-hot.
    lp_tgt_logits = jnp.sum(jnp.where(iota_v == tgt, logits, 0.0),
                            axis=-1, keepdims=True)              # (R, 1)
    lp_tgt_ref[...] = lp_tgt_logits - lse

    # Greedy token: argmax(logp) == argmax(logits); its logp == max - lse.
    lp_max_ref[...] = m - lse
    amax_ref[...] = jnp.min(
        jnp.where(logits == m, iota_v, jnp.int32(v_pad)),
        axis=-1, keepdims=True)


def _fused_model_head(x, W, target):
    """For each (b, t): logp[target], logp[argmax], argmax over the vocab.

    x:      (B, T, H) f32 hidden states
    W:      (H, V)    f32 output projection
    target: (B, T)    int32
    returns (lp_tgt, lp_max, amax_tok), each (B, T)
    """
    B, T, H = x.shape
    V = W.shape[1]
    n_rows = B * T

    v_pad = _round_up(V, 128)                 # lane-dense vocab
    tile_r = _choose_tile_r(n_rows, v_pad)
    nr_pad = pl.cdiv(n_rows, tile_r) * tile_r
    grid = (nr_pad // tile_r,)

    x2d = x.reshape(n_rows, H).astype(jnp.bfloat16)      # bf16 MXU operands
    if nr_pad != n_rows:
        x2d = jnp.pad(x2d, ((0, nr_pad - n_rows), (0, 0)))
    w = W.astype(jnp.bfloat16)
    if v_pad != V:
        w = jnp.pad(w, ((0, 0), (0, v_pad - V)))
    tgt = target.reshape(n_rows, 1).astype(jnp.int32)
    if nr_pad != n_rows:
        tgt = jnp.pad(tgt, ((0, nr_pad - n_rows), (0, 0)))

    kernel = functools.partial(_fused_logp_kernel, v_real=V)
    lp_tgt, lp_max, amax = pl.pallas_call(
        kernel,
        out_shape=(
            jax.ShapeDtypeStruct((nr_pad, 1), jnp.float32),
            jax.ShapeDtypeStruct((nr_pad, 1), jnp.float32),
            jax.ShapeDtypeStruct((nr_pad, 1), jnp.int32),
        ),
        grid_spec=pltpu.PrefetchScalarGridSpec(
            num_scalar_prefetch=0,
            grid=grid,
            in_specs=[
                pl.BlockSpec((tile_r, H), lambda i: (i, 0)),     # x rows, pipelined
                pl.BlockSpec((H, v_pad), lambda i: (0, 0)),      # W resident
                pl.BlockSpec((tile_r, 1), lambda i: (i, 0)),     # targets
            ],
            out_specs=(
                pl.BlockSpec((tile_r, 1), lambda i: (i, 0)),
                pl.BlockSpec((tile_r, 1), lambda i: (i, 0)),
                pl.BlockSpec((tile_r, 1), lambda i: (i, 0)),
            ),
        ),
        compiler_params=pltpu.CompilerParams(
            dimension_semantics=("parallel",),                   # megacore split on v7x
            vmem_limit_bytes=48 * 1024 * 1024,
        ),
    )(x2d, w, tgt)

    lp_tgt = lp_tgt[:n_rows, 0].reshape(B, T)
    lp_max = lp_max[:n_rows, 0].reshape(B, T)
    amax = amax[:n_rows, 0].reshape(B, T)
    return lp_tgt, lp_max, amax


# ----------------------------------------------------------------------------
# ImportanceSampler.forward  (combine_loss=False, penalize_confidence=0,
# lazy_rnn=True, eval mode => MC = 1)
# ----------------------------------------------------------------------------
def importance_sampler_forward(fc_feats, labels, mask, params, scores=None):
    emb, U, W = params
    B, Tp1 = labels.shape
    T = Tp1 - 1

    tokens = labels[:, :-1]                                   # (B, T) input tokens
    target = labels[:, 1:][:, :T].astype(jnp.int32)           # (B, T) targets
    # Synthetic caption model hidden states (embedding gather + image feature).
    x = emb[tokens] + (fc_feats @ U)[:, None, :]              # (B, T, H) glue

    # Fused: matmul + log-softmax + target gather + argmax in one HBM pass,
    # (B, T, V) log-probs never materialized.
    lp_tgt, lp_max, sampled_tok = _fused_model_head(x, W, target)

    mask_t = mask[:, :T].astype(jnp.float32)
    if scores is not None:
        mask_t = mask_t * jnp.broadcast_to(
            scores.reshape(B, 1).astype(jnp.float32), (B, T))

    # GT loss: get_ml_loss hot path, now reduced over (B, T) only.
    loss_gt = _masked_nll(lp_tgt, mask_t)

    # --- one Monte-Carlo sample (MC = 1 in eval mode) ---
    # TODO(synk): hamming / p_theta sampler has no Pallas equivalent; use the
    # deterministic greedy argmax of logp as the sampled sequence.
    denom = jnp.maximum(jnp.sum(mask_t, axis=1), 1.0)
    sampled_q = jnp.exp(jnp.sum(lp_max * mask_t, axis=1) / denom)        # (B,)

    # TODO(synk): CIDEr / BLEU scorer has no Pallas equivalent; use the
    # exp(-hamming) sentence reward surrogate (positive, deterministic).
    hamming = jnp.sum((sampled_tok != target).astype(jnp.float32) * mask_t,
                      axis=1) / denom
    sampled_rewards = jnp.exp(-hamming)                                   # (B,)

    importance = sampled_rewards / sampled_q
    importance_normalized = importance / jnp.mean(importance)
    stats = {
        'importance_mean': jnp.mean(importance_normalized),
        'importance_std': jnp.std(importance_normalized),
    }

    # lazy_rnn path: sampled-caption NLL on the GT logits with the mask
    # reweighted by per-sentence importance.  Because the surrogate sample is
    # the greedy argmax, logp[b, t, sampled_tok[b, t]] == lp_max[b, t], so no
    # second pass over the vocab-sized tensor is needed.
    w_sampled = mask_t * importance_normalized[:, None]
    output = _masked_nll(lp_max, w_sampled)

    return loss_gt, output, stats


if __name__ == "__main__":
    B, T, Dfc, H, V = 2, 8, 16, 32, 128
    key = jax.random.PRNGKey(0)
    k1, k2, k3, k4, k5 = jax.random.split(key, 5)

    fc_feats = jax.random.normal(k1, (B, Dfc), jnp.float32)
    labels = jax.random.randint(k2, (B, T + 1), 0, V).astype(jnp.int32)
    mask = jnp.concatenate(
        [jnp.ones((B, T - 2), jnp.float32), jnp.zeros((B, 2), jnp.float32)], axis=1)

    # Deterministic parameter init (synthetic caption-model weights).
    emb = 0.1 * jax.random.normal(k3, (V, H), jnp.float32)
    U = 0.1 * jax.random.normal(k4, (Dfc, H), jnp.float32)
    W = 0.1 * jax.random.normal(k5, (H, V), jnp.float32)

    loss_gt, output, stats = importance_sampler_forward(
        fc_feats, labels, mask, (emb, U, W))
    jax.block_until_ready((loss_gt, output, stats))
    assert jnp.isfinite(loss_gt) and jnp.isfinite(output)
    assert jnp.isfinite(stats['importance_mean']) and jnp.isfinite(stats['importance_std'])
    print("KERNEL_OK")
</pallas_src>

<mosaic_0001>
module attributes {stable_mosaic.version = 11 : i64} {
  func.func @_fused_logp_kernel(%arg0: i32, %arg1: memref<16x32xbf16, #tpu.memory_space<vmem>>, %arg2: memref<32x128xbf16, #tpu.memory_space<vmem>>, %arg3: memref<16x1xi32, #tpu.memory_space<vmem>>, %arg4: memref<16x1xf32, #tpu.memory_space<vmem>>, %arg5: memref<16x1xf32, #tpu.memory_space<vmem>>, %arg6: memref<16x1xi32, #tpu.memory_space<vmem>>) attributes {dimension_semantics = [#tpu.dimension_semantics<parallel>], iteration_bounds = array<i64: 1>, scalar_prefetch = 0 : i64, scratch_operands = 0 : i64, tpu.core_type = #tpu.core_type<tc>, window_params = [{transform_indices = @transform_0, window_bounds = array<i64: 16, 32>}, {pipeline_mode = #tpu.pipeline_mode<synchronous>, transform_indices = @transform_1, window_bounds = array<i64: 32, 128>}, {transform_indices = @transform_2, window_bounds = array<i64: 16, 1>}, {transform_indices = @transform_3, window_bounds = array<i64: 16, 1>}, {transform_indices = @transform_4, window_bounds = array<i64: 16, 1>}, {transform_indices = @transform_5, window_bounds = array<i64: 16, 1>}]} {
    %c0 = arith.constant 0 : index
    %c0_0 = arith.constant 0 : index
    %0 = vector.load %arg1[%c0, %c0_0] : memref<16x32xbf16, #tpu.memory_space<vmem>>, vector<16x32xbf16>
    %c0_1 = arith.constant 0 : index
    %c0_2 = arith.constant 0 : index
    %1 = vector.load %arg2[%c0_1, %c0_2] : memref<32x128xbf16, #tpu.memory_space<vmem>>, vector<32x128xbf16>
    %cst = arith.constant dense<0.000000e+00> : vector<16x128xf32>
    %2 = tpu.matmul %0, %1, %cst {dimension_numbers = #tpu.dot_dimension_numbers<[1], [0], [0], [1], [0, 0, 1, 1], [], []>} : vector<16x32xbf16>, vector<32x128xbf16>, vector<16x128xf32> -> vector<16x128xf32>
    %3 = tpu.iota {dimensions = array<i32: 1>} : vector<16x128xi32>
    %cst_3 = arith.constant dense<0xFF800000> : vector<16xf32>
    %4 = vector.multi_reduction <maximumf>, %2, %cst_3 [1] : vector<16x128xf32> to vector<16xf32>
    %5 = vector.shape_cast %4 : vector<16xf32> to vector<16x1xf32>
    %6 = vector.broadcast %5 : vector<16x1xf32> to vector<16x128xf32>
    %7 = arith.subf %2, %6 : vector<16x128xf32>
    %8 = math.exp %7 : vector<16x128xf32>
    %cst_4 = arith.constant dense<0.000000e+00> : vector<16xf32>
    %9 = vector.multi_reduction <add>, %8, %cst_4 [1] : vector<16x128xf32> to vector<16xf32>
    %10 = vector.shape_cast %9 : vector<16xf32> to vector<16x1xf32>
    %11 = math.log %10 : vector<16x1xf32>
    %12 = arith.addf %11, %5 : vector<16x1xf32>
    %c0_5 = arith.constant 0 : index
    %c0_6 = arith.constant 0 : index
    %13 = vector.load %arg3[%c0_5, %c0_6] : memref<16x1xi32, #tpu.memory_space<vmem>>, vector<16x1xi32>
    %14 = vector.broadcast %13 : vector<16x1xi32> to vector<16x128xi32>
    %15 = arith.cmpi eq, %3, %14 : vector<16x128xi32>
    %cst_7 = arith.constant 0.000000e+00 : f32
    %16 = vector.broadcast %cst_7 : f32 to vector<16x128xf32>
    %17 = arith.select %15, %2, %16 : vector<16x128xi1>, vector<16x128xf32>
    %cst_8 = arith.constant dense<0.000000e+00> : vector<16xf32>
    %18 = vector.multi_reduction <add>, %17, %cst_8 [1] : vector<16x128xf32> to vector<16xf32>
    %19 = vector.shape_cast %18 : vector<16xf32> to vector<16x1xf32>
    %20 = arith.subf %19, %12 : vector<16x1xf32>
    %c0_9 = arith.constant 0 : index
    %c0_10 = arith.constant 0 : index
    %21 = vector.load %arg4[%c0_9, %c0_10] : memref<16x1xf32, #tpu.memory_space<vmem>>, vector<16x1xf32>
    tpu.vector_store %arg4[%c0_9, %c0_10], %20 {strides = array<i32>} : memref<16x1xf32, #tpu.memory_space<vmem>>, vector<16x1xf32>,
    %22 = arith.subf %5, %12 : vector<16x1xf32>
    %c0_11 = arith.constant 0 : index
    %c0_12 = arith.constant 0 : index
    %23 = vector.load %arg5[%c0_11, %c0_12] : memref<16x1xf32, #tpu.memory_space<vmem>>, vector<16x1xf32>
    tpu.vector_store %arg5[%c0_11, %c0_12], %22 {strides = array<i32>} : memref<16x1xf32, #tpu.memory_space<vmem>>, vector<16x1xf32>,
    %24 = vector.broadcast %5 : vector<16x1xf32> to vector<16x128xf32>
    %25 = arith.cmpf oeq, %2, %24 : vector<16x128xf32>
    %c128_i32 = arith.constant 128 : i32
    %26 = vector.broadcast %c128_i32 : i32 to vector<16x128xi32>
    %27 = arith.select %25, %3, %26 : vector<16x128xi1>, vector<16x128xi32>
    %cst_13 = arith.constant dense<2147483647> : vector<16xi32>
    %28 = vector.multi_reduction <minsi>, %27, %cst_13 [1] : vector<16x128xi32> to vector<16xi32>
    %29 = vector.shape_cast %28 : vector<16xi32> to vector<16x1xi32>
    %c0_14 = arith.constant 0 : index
    %c0_15 = arith.constant 0 : index
    %30 = vector.load %arg6[%c0_14, %c0_15] : memref<16x1xi32, #tpu.memory_space<vmem>>, vector<16x1xi32>
    tpu.vector_store %arg6[%c0_14, %c0_15], %29 {strides = array<i32>} : memref<16x1xi32, #tpu.memory_space<vmem>>, vector<16x1xi32>,
    return
  }
  func.func @transform_0(%arg0: i32) -> (i32, i32) {
    %c0_i32 = arith.constant 0 : i32
    %c0_i32_0 = arith.constant 0 : i32
    return %arg0, %c0_i32 : i32, i32
  }
  func.func @transform_1(%arg0: i32) -> (i32, i32) {
    %c0_i32 = arith.constant 0 : i32
    %c0_i32_0 = arith.constant 0 : i32
    %c0_i32_1 = arith.constant 0 : i32
    return %c0_i32, %c0_i32_0 : i32, i32
  }
  func.func @transform_2(%arg0: i32) -> (i32, i32) {
    %c0_i32 = arith.constant 0 : i32
    %c0_i32_0 = arith.constant 0 : i32
    return %arg0, %c0_i32 : i32, i32
  }
  func.func @transform_3(%arg0: i32) -> (i32, i32) {
    %c0_i32 = arith.constant 0 : i32
    %c0_i32_0 = arith.constant 0 : i32
    return %arg0, %c0_i32 : i32, i32
  }
  func.func @transform_4(%arg0: i32) -> (i32, i32) {
    %c0_i32 = arith.constant 0 : i32
    %c0_i32_0 = arith.constant 0 : i32
    return %arg0, %c0_i32 : i32, i32
  }
  func.func @transform_5(%arg0: i32) -> (i32, i32) {
    %c0_i32 = arith.constant 0 : i32
    %c0_i32_0 = arith.constant 0 : i32
    return %arg0, %c0_i32 : i32, i32
  }
}

</mosaic_0001>

<llo_original>
// kernel: tpu_custom_call.1
$region0: #{tpu_custom_call.1}
  #allocation0 [shape = 'u32[]', space=smem, size = 0x4, offset = 0x4, fixed_abs, tag = 'smem constant byte address 0x4 - core index']
  #allocation1 [shape = 'u32[144,128]{1,0:T(1,128)}', space=vmem, size = 0x12000, scoped, tag = 'internal scratch']
  %s0 = inlined_call_operand.hbm [shape: bf16[16,32], index: 0, kind: input, shape index: {}]
  %s1 = inlined_call_operand.vmem [shape: bf16[32,128], index: 1, kind: input, shape index: {}]
  %s2 = inlined_call_operand.vmem [shape: s32[16,1], index: 2, kind: input, shape index: {}]
  %s3 = inlined_call_operand.vmem [shape: f32[16,1], index: 3, kind: output, shape index: {0}]
  %s4 = inlined_call_operand.vmem [shape: f32[16,1], index: 4, kind: output, shape index: {1}]
  %s5 = inlined_call_operand.vmem [shape: s32[16,1], index: 5, kind: output, shape index: {2}]
  %6 = xla_tuple %s3, %s4, %s5
  %s7 = sld [smem:[#allocation0]]
  $region42: #{tpu_custom_call.1} parent=0
    _
  %s9 = ssub.s32 1, %s7
  %s10 = scalar_select 0, %s9, %s7
  $region1: #{tpu_custom_call.1} parent=0
    #allocation2 [shape = 'u8[4096]{0}', space=vmem, size = 0x1000, scoped, tag = 'input window, operand 0, single buffered']
    #allocation3 [shape = 's32[1]{0}', space=sflag, size = 0x4, scoped, tag = 'scoped memory for tpu_custom_call.1']
    %11 = vsyncpa [#allocation3], 0
    // Predicated region
    $region2: #{tpu_custom_call.1} parent=1 // pred_check
      _
    $region3: #{tpu_custom_call.1} parent=1 // pred_check_branch
      %13 = sbr.rel (0) target = $region5
    $region4: #{tpu_custom_call.1} parent=1 // pred_region
      %s15 = ssub.s32 128, 128
      %16 = vsyncadd [#allocation3], %s15
      %s17 = sshll.u32 [#allocation2], 4
      %s18 = int_to_ptr.vmem [resolvable:$true] %s17
      %23 = dma.hbm_to_vmem [thread:$0]  %s0, 128, %s18, [#allocation3], 64, 64, 4
    $region5: #{tpu_custom_call.1} parent=1 // pred_fallthru
      _
    // Predicated region
    $region6: #{tpu_custom_call.1} parent=1 // pred_check
      _
    $region7: #{tpu_custom_call.1} parent=1 // pred_check_branch
      %25 = sbr.rel (0) target = $region9
    $region8: #{tpu_custom_call.1} parent=1 // pred_region
      _
    $region9: #{tpu_custom_call.1} parent=1 // pred_fallthru
      _
    // Predicated region
    $region10: #{tpu_custom_call.1} parent=1 // pred_check
      _
    $region11: #{tpu_custom_call.1} parent=1 // pred_check_branch
      %27 = sbr.rel (0) target = $region13
    $region12: #{tpu_custom_call.1} parent=1 // pred_region
      _
    $region13: #{tpu_custom_call.1} parent=1 // pred_fallthru
      _
    // Predicated region
    $region14: #{tpu_custom_call.1} parent=1 // pred_check
      _
    $region15: #{tpu_custom_call.1} parent=1 // pred_check_branch
      %29 = sbr.rel (0) target = $region17
    $region16: #{tpu_custom_call.1} parent=1 // pred_region
      %30 = dma.done [#allocation3], 128
    $region17: #{tpu_custom_call.1} parent=1 // pred_fallthru
      _
    %v32 = vld [vmem:[#allocation2] sm:$0xf]
    %v33 = vld [vmem:[#allocation2 + $0x4] sm:$0xf]
    %v34 = vld [vmem:[%s1] sm:$0xf]
    %v35 = vld [vmem:[%s1 + $0x4] sm:$0xf]
    %v36 = vld [vmem:[%s1 + $0x8] sm:$0xf]
    %v37 = vld [vmem:[%s1 + $0xc] sm:$0xf]
    %v40 = vunpack.c.l.b16 %v32
    %v41 = vunpack.c.l.b16 %v33
    %v42 = vpack.c.b16 %v41, %v40
    %v47 = vunpack.c.l.b16 %v34
    %v48 = vunpack.c.l.b16 %v35
    %v49 = vunpack.c.l.b16 %v36
    %v50 = vunpack.c.l.b16 %v37
    %v51 = vpack.c.b16 %v48, %v47
    %v52 = vpack.c.b16 %v50, %v49
    %vm55 = vcmask 261120
    %v57 = vsel %vm55, %v42, 0
    %59 = vmatprep.subr.bf16.mxu0 0
    %60 = vmatpush1.bf16.msra.mxu0 %v51
    %61 = vmatprep.subr.bf16.mxu0 0
    %62 = vmatpush1.bf16.msra.mxu0 %v52
    %63 = vmatprep.subr.bf16.mxu0 0
    %64 = vmatpush1.bf16.msra.mxu0 0
    %65 = vmatprep.subr.bf16.mxu0 0
    %66 = vmatpush1.bf16.msra.mxu0 0
    %67 = vmatprep.subr.bf16.mxu0 0
    %68 = vmatpush1.bf16.msra.mxu0 0
    %69 = vmatprep.subr.bf16.mxu0 0
    %70 = vmatpush1.bf16.msra.mxu0 0
    %71 = vmatprep.subr.bf16.mxu0 0
    %72 = vmatpush1.bf16.msra.mxu0 0
    %73 = vmatprep.subr.bf16.mxu0 0
    %74 = vmatpush1.bf16.msra.mxu0 0
    %75 = vmatprep.subr.bf16.mxu0 0
    %76 = vmatpush1.bf16.msra.mxu0 0
    %77 = vmatprep.subr.bf16.mxu0 0
    %78 = vmatpush1.bf16.msra.mxu0 0
    %79 = vmatprep.subr.bf16.mxu0 0
    %80 = vmatpush1.bf16.msra.mxu0 0
    %81 = vmatprep.subr.bf16.mxu0 0
    %82 = vmatpush1.bf16.msra.mxu0 0
    %83 = vmatprep.subr.bf16.mxu0 0
    %84 = vmatpush1.bf16.msra.mxu0 0
    %85 = vmatprep.subr.bf16.mxu0 0
    %86 = vmatpush1.bf16.msra.mxu0 0
    %87 = vmatprep.subr.bf16.mxu0 0
    %88 = vmatpush1.bf16.msra.mxu0 0
    %89 = vmatprep.subr.bf16.mxu0 0
    %90 = vmatpush1.bf16.msra.mxu0 0
    %91 = vmatprep.mubr.bf16.mxu0 0
    %92 = vmatmul.mubr.bf16.gmra.mrb[0].mxu0 %v57
    %v93 = vpop.f32.mrb[0].mxu0
    %v94 = vadd.f32 0.0, %v93
    %v95 = vpop.f32.mrb[0].mxu0
    %v96 = vpop.f32.mrb[0].mxu0
    %v97 = vadd.f32 0.0, %v96
    %v98 = vpop.f32.mrb[0].mxu0
    %99 = vdwg.mxu0
    %v100 = vlaneseq
    %v101 = vand.u32 %v100, 127
    %102 = vmax.xlane.f32.xlu0 %v94
    %v103 = vpop.xlane.xlu0 %102
    %104 = vmax.xlane.f32.xlu0 %v97
    %v105 = vpop.xlane.xlu0 %104
    %v106 = vsub.f32 %v94, %v103
    %v107 = vsub.f32 %v97, %v105
    %v108 = vmul.f32 %v106, 1.442695
    %v109 = vpow.pop %v108
    %v110 = vmul.f32 %v107, 1.442695
    %v111 = vpow.pop %v110
    %112 = vadd.xlane.f32.xlu0 %v109
    %v113 = vpop.xlane.xlu0 %112
    %114 = vadd.xlane.f32.xlu0 %v111
    %v115 = vpop.xlane.xlu0 %114
    %v116 = vlog2.pop %v113
    %v117 = vmul.f32 %v116, 0.6931472
    %v118 = vlog2.pop %v115
    %v119 = vmul.f32 %v118, 0.6931472
    %v120 = vadd.f32 %v117, %v103
    %v121 = vadd.f32 %v119, %v105
    %v122 = vld [vmem:[%s2] sm:$0xff]
    %v123 = vld [vmem:[%s2 + $0x8] sm:$0xff]
    %124 = vset.pattern.permute.xlu0 0
    %125 = vperm.xlu0 %124, %v122
    %v126 = vpop.permute.xlu0 %125
    %127 = vset.pattern.permute.xlu0 0
    %128 = vperm.xlu0 %127, %v123
    %v129 = vpop.permute.xlu0 %128
    %vm130 = vcmp.eq.s32.totalorder %v101, %v126
    %vm131 = vcmp.eq.s32.totalorder %v101, %v129
    %v132 = vsel %vm130, %v94, 0.0
    %v133 = vsel %vm131, %v97, 0.0
    %134 = vadd.xlane.f32.xlu0 %v132
    %v135 = vpop.xlane.xlu0 %134
    %136 = vadd.xlane.f32.xlu0 %v133
    %v137 = vpop.xlane.xlu0 %136
    %v138 = vsub.f32 %v135, %v120
    %v139 = vsub.f32 %v137, %v121
    %vm140 = vcmask 7168
    %141 = vst.msk [vmem:[%s3] sm:$0xff] %vm140, %v138
    %142 = vst.msk [vmem:[%s3 + $0x8] sm:$0xff] %vm140, %v139
    %v143 = vsub.f32 %v103, %v120
    %v144 = vsub.f32 %v105, %v121
    %145 = vst.msk [vmem:[%s4] sm:$0xff] %vm140, %v143
    %146 = vst.msk [vmem:[%s4 + $0x8] sm:$0xff] %vm140, %v144
    %vm147 = vcmp.eq.f32.partialorder %v94, %v103
    %vm148 = vcmp.eq.f32.partialorder %v97, %v105
    %v149 = vsel %vm147, %v101, 128
    %v150 = vsel %vm148, %v101, 128
    %v151 = vand.u32 %v149, 65535
    %v152 = vshra.s32 %v149, 16
    %v153 = vcvt.s32.f32 %v151
    %v154 = vcvt.s32.f32 %v152
    %155 = vmin.xlane.f32.xlu0 %v154
    %v156 = vpop.xlane.xlu0 %155
    %vm157 = vcmp.eq.f32.partialorder %v154, %v156
    %v158 = vsel %vm157, %v153, inf
    %159 = vmin.xlane.f32.xlu0 %v158
    %v160 = vpop.xlane.xlu0 %159
    %v161 = vcvt.f32.s32 %v160
    %v162 = vcvt.f32.s32 %v156
    %v163 = vshll.u32 %v162, 16
    %v164 = vadd.s32 %v163, %v161
    %v165 = vand.u32 %v150, 65535
    %v166 = vshra.s32 %v150, 16
    %v167 = vcvt.s32.f32 %v165
    %v168 = vcvt.s32.f32 %v166
    %169 = vmin.xlane.f32.xlu0 %v168
    %v170 = vpop.xlane.xlu0 %169
    %vm171 = vcmp.eq.f32.partialorder %v168, %v170
    %v172 = vsel %vm171, %v167, inf
    %173 = vmin.xlane.f32.xlu0 %v172
    %v174 = vpop.xlane.xlu0 %173
    %v175 = vcvt.f32.s32 %v174
    %v176 = vcvt.f32.s32 %v170
    %v177 = vshll.u32 %v176, 16
    %v178 = vadd.s32 %v177, %v175
    %179 = vst.msk [vmem:[%s5] sm:$0xff] %vm140, %v164
    %180 = vst.msk [vmem:[%s5 + $0x8] sm:$0xff] %vm140, %v178
    // Predicated region
    $region18: #{tpu_custom_call.1} parent=1 // pred_check
      _
    $region19: #{tpu_custom_call.1} parent=1 // pred_check_branch
      %182 = sbr.rel (0) target = $region21
    $region20: #{tpu_custom_call.1} parent=1 // pred_region
      _
    $region21: #{tpu_custom_call.1} parent=1 // pred_fallthru
      _
    // Predicated region
    $region22: #{tpu_custom_call.1} parent=1 // pred_check
      _
    $region23: #{tpu_custom_call.1} parent=1 // pred_check_branch
      %184 = sbr.rel (0) target = $region25
    $region24: #{tpu_custom_call.1} parent=1 // pred_region
      _
    $region25: #{tpu_custom_call.1} parent=1 // pred_fallthru
      _
    // Predicated region
    $region26: #{tpu_custom_call.1} parent=1 // pred_check
      _
    $region27: #{tpu_custom_call.1} parent=1 // pred_check_branch
      %186 = sbr.rel (0) target = $region29
    $region28: #{tpu_custom_call.1} parent=1 // pred_region
      _
    $region29: #{tpu_custom_call.1} parent=1 // pred_fallthru
      _
    // Predicated region
    $region30: #{tpu_custom_call.1} parent=1 // pred_check
      _
    $region31: #{tpu_custom_call.1} parent=1 // pred_check_branch
      %188 = sbr.rel (0) target = $region33
    $region32: #{tpu_custom_call.1} parent=1 // pred_region
      _
    $region33: #{tpu_custom_call.1} parent=1 // pred_fallthru
      _
    // Predicated region
    $region34: #{tpu_custom_call.1} parent=1 // pred_check
      _
    $region35: #{tpu_custom_call.1} parent=1 // pred_check_branch
      %190 = sbr.rel (0) target = $region37
    $region36: #{tpu_custom_call.1} parent=1 // pred_region
      _
    $region37: #{tpu_custom_call.1} parent=1 // pred_fallthru
      _
    // Predicated region
    $region38: #{tpu_custom_call.1} parent=1 // pred_check
      _
    $region39: #{tpu_custom_call.1} parent=1 // pred_check_branch
      %192 = sbr.rel (0) target = $region41
    $region40: #{tpu_custom_call.1} parent=1 // pred_region
      _
    $region41: #{tpu_custom_call.1} parent=1 // pred_fallthru
      _
    %193 = vsyncpa [#allocation3], 1

</llo_original>
